<compile_context>
chip_gen: v6e
topology: v6e:2x2x1
jax: 0.10.0
libtpu: 0.0.40
codegen_flags: <defaults>
</compile_context>

<pallas_src>
import functools

import jax
import jax.numpy as jnp
from jax.experimental import pallas as pl
from jax.experimental.pallas import tpu as pltpu


# ----------------------------- kernels ---------------------------------------


def _resblock_kernel_shortcut(x_ref, w0_ref, b0_ref, w1_ref, b1_ref, ws_ref, o_ref):
    # Whole hot path (cos -> fc0 -> cos -> fc1 -> shortcut matmul -> residual add) on one
    # lane-dense row tile.  Dot operands take the weights' dtype (f32 or bf16); accumulation,
    # bias adds and the residual add stay in f32.
    x = x_ref[...].astype(jnp.float32)
    wdt = w0_ref.dtype
    net = (
        jnp.dot(jnp.cos(x).astype(wdt), w0_ref[...], preferred_element_type=jnp.float32)
        + b0_ref[...]
    )
    dx = (
        jnp.dot(jnp.cos(net).astype(wdt), w1_ref[...], preferred_element_type=jnp.float32)
        + b1_ref[...]
    )
    x_s = jnp.dot(x.astype(ws_ref.dtype), ws_ref[...], preferred_element_type=jnp.float32)
    o_ref[...] = (x_s + dx).astype(o_ref.dtype)


def _resblock_kernel_identity(x_ref, w0_ref, b0_ref, w1_ref, b1_ref, o_ref):
    # size_in == size_out: shortcut is identity (no extra matmul), exactly as in PyTorch.
    x = x_ref[...].astype(jnp.float32)
    wdt = w0_ref.dtype
    net = (
        jnp.dot(jnp.cos(x).astype(wdt), w0_ref[...], preferred_element_type=jnp.float32)
        + b0_ref[...]
    )
    dx = (
        jnp.dot(jnp.cos(net).astype(wdt), w1_ref[...], preferred_element_type=jnp.float32)
        + b1_ref[...]
    )
    o_ref[...] = (x + dx).astype(o_ref.dtype)


# ----------------------------- helpers ----------------------------------------


def _round_up(x, m):
    return (x + m - 1) // m * m


def _pad_to(a, target_shape):
    pads = [(0, t - s) for s, t in zip(a.shape, target_shape)]
    if all(p == (0, 0) for p in pads):
        return a
    return jnp.pad(a, pads)


def _choose_row_tile(n, requested, in_pad, h_pad, out_pad, x_bytes, w_bytes):
    """Pick a sublane-aligned row tile: as big as requested, but keep >=2 grid steps
    when there is enough work (megacore) and keep resident VMEM under budget."""
    n8 = _round_up(max(n, 1), 8)
    rt = max(8, _round_up(min(requested, n8), 8))
    # Keep at least 2 parallel grid steps when there are >= 16 rows of work.
    if n8 >= 16 and pl.cdiv(n8, rt) < 2:
        rt = max(8, _round_up(pl.cdiv(n8, 2), 8))

    def vmem_estimate(tile):
        io = 2 * tile * (in_pad + out_pad) * x_bytes          # double-buffered x/out tiles
        w = 2 * (in_pad * h_pad + h_pad * out_pad + in_pad * out_pad) * w_bytes
        b = 2 * (h_pad + out_pad) * 4
        return io + w + b

    budget = 36 * 2**20  # headroom for v7x's 64 MiB/TC VMEM
    while vmem_estimate(rt) > budget and rt > 8:
        rt = max(8, _round_up(rt // 2, 8))
    return rt, vmem_estimate(rt)


# ----------------------------- wrapper ----------------------------------------


@functools.partial(jax.jit, static_argnames=("row_tile", "use_bf16_matmul"))
def resnet_block_fc(x, w0, b0, w1, b1, ws=None, *, row_tile=512, use_bf16_matmul=False):
    """Apply the ResnetBlockFC forward pass with a fused Pallas TPU kernel.

    x  : (N, size_in)
    w0 : (size_in, size_h)   b0 : (1, size_h)
    w1 : (size_h, size_out)  b1 : (1, size_out)
    ws : (size_in, size_out) or None (identity shortcut, requires size_in == size_out)
    """
    n, size_in = x.shape
    size_h = w0.shape[1]
    size_out = w1.shape[1]
    if ws is None:
        assert size_in == size_out, "identity shortcut needs size_in == size_out"

    # Lane-dense padding of every feature axis (128 lanes).  Zero-padded weight rows/cols
    # make the extra lanes contribute exactly 0 even though cos(0) = 1.
    in_pad = _round_up(size_in, 128)
    h_pad = _round_up(size_h, 128)
    out_pad = _round_up(size_out, 128)

    w_dtype = jnp.bfloat16 if use_bf16_matmul else jnp.float32
    w_bytes = 2 if use_bf16_matmul else 4
    x_bytes = x.dtype.itemsize

    rt, vmem_est = _choose_row_tile(n, row_tile, in_pad, h_pad, out_pad, x_bytes, w_bytes)
    n_pad = _round_up(max(n, 1), rt)
    grid = (n_pad // rt,)

    # Pad operands (zeros everywhere outside the logical extents).
    x_p = _pad_to(x, (n_pad, in_pad))
    w0_p = _pad_to(w0, (in_pad, h_pad)).astype(w_dtype)
    b0_p = _pad_to(b0.reshape(1, -1), (1, h_pad)).astype(jnp.float32)
    w1_p = _pad_to(w1, (h_pad, out_pad)).astype(w_dtype)
    b1_p = _pad_to(b1.reshape(1, -1), (1, out_pad)).astype(jnp.float32)

    x_spec = pl.BlockSpec((rt, in_pad), lambda i: (i, 0))
    o_spec = pl.BlockSpec((rt, out_pad), lambda i: (i, 0))
    w0_spec = pl.BlockSpec((in_pad, h_pad), lambda i: (0, 0))
    b0_spec = pl.BlockSpec((1, h_pad), lambda i: (0, 0))
    w1_spec = pl.BlockSpec((h_pad, out_pad), lambda i: (0, 0))
    b1_spec = pl.BlockSpec((1, out_pad), lambda i: (0, 0))

    # Cost estimate (advisory, lets XLA schedule around the custom call).
    matmul_flops = in_pad * h_pad + h_pad * out_pad + (in_pad * out_pad if ws is not None else 0)
    cost = pl.CostEstimate(
        flops=int(2 * n_pad * matmul_flops),
        transcendentals=int(n_pad * (in_pad + h_pad)),
        bytes_accessed=int(
            n_pad * (in_pad * x_bytes + out_pad * x_bytes)
            + (in_pad * h_pad + h_pad * out_pad + (in_pad * out_pad if ws is not None else 0)) * w_bytes
            + (h_pad + out_pad) * 4
        ),
    )
    compiler_params = pltpu.CompilerParams(
        dimension_semantics=("parallel",),
        vmem_limit_bytes=int(min(56 * 2**20, max(24 * 2**20, int(1.5 * vmem_est)))),
    )
    out_shape = jax.ShapeDtypeStruct((n_pad, out_pad), x.dtype)

    if ws is not None:
        ws_p = _pad_to(ws, (in_pad, out_pad)).astype(w_dtype)
        ws_spec = pl.BlockSpec((in_pad, out_pad), lambda i: (0, 0))
        out_p = pl.pallas_call(
            _resblock_kernel_shortcut,
            out_shape=out_shape,
            grid_spec=pltpu.PrefetchScalarGridSpec(
                num_scalar_prefetch=0,
                grid=grid,
                in_specs=[x_spec, w0_spec, b0_spec, w1_spec, b1_spec, ws_spec],
                out_specs=o_spec,
            ),
            compiler_params=compiler_params,
            cost_estimate=cost,
        )(x_p, w0_p, b0_p, w1_p, b1_p, ws_p)
    else:
        out_p = pl.pallas_call(
            _resblock_kernel_identity,
            out_shape=out_shape,
            grid_spec=pltpu.PrefetchScalarGridSpec(
                num_scalar_prefetch=0,
                grid=grid,
                in_specs=[x_spec, w0_spec, b0_spec, w1_spec, b1_spec],
                out_specs=o_spec,
            ),
            compiler_params=compiler_params,
            cost_estimate=cost,
        )(x_p, w0_p, b0_p, w1_p, b1_p)

    return out_p[:n, :size_out]


# ----------------------------- reference (pure JAX) ----------------------------


def resnet_block_fc_ref(x, w0, b0, w1, b1, ws=None):
    net = jnp.cos(x) @ w0 + b0
    dx = jnp.cos(net) @ w1 + b1
    x_s = x if ws is None else x @ ws
    return x_s + dx


# ----------------------------- demo -------------------------------------------


def _init_params(key, size_in, size_out, size_h):
    """Deterministic synthetic init mirroring the PyTorch module's parameter shapes.

    fc_0: Linear(size_in, size_h)          -> w0 (size_in, size_h), b0 (1, size_h)
    fc_1: Linear(size_h, size_out)         -> w1 zero-init (matches nn.init.zeros_), b1 (1, size_out)
    shortcut: Linear(size_in, size_out, bias=False) when size_in != size_out.
    """
    k0, kb0, kb1, ks = jax.random.split(key, 4)
    bound0 = 1.0 / jnp.sqrt(size_in)
    bound1 = 1.0 / jnp.sqrt(size_h)
    w0 = jax.random.uniform(k0, (size_in, size_h), jnp.float32, -bound0, bound0)
    b0 = jax.random.uniform(kb0, (1, size_h), jnp.float32, -bound0, bound0)
    w1 = jnp.zeros((size_h, size_out), jnp.float32)  # nn.init.zeros_(fc_1.weight)
    b1 = jax.random.uniform(kb1, (1, size_out), jnp.float32, -bound1, bound1)
    if size_in != size_out:
        ws = jax.random.uniform(ks, (size_in, size_out), jnp.float32, -bound0, bound0)
    else:
        ws = None
    return w0, b0, w1, b1, ws


if __name__ == "__main__":
    key = jax.random.PRNGKey(0)
    kx, kp = jax.random.split(key)

    # Small shapes consistent with the module: size_in=32, size_out=48 -> size_h=min=32.
    N, SIZE_IN, SIZE_OUT = 16, 32, 48
    SIZE_H = min(SIZE_IN, SIZE_OUT)

    x = jax.random.normal(kx, (N, SIZE_IN), jnp.float32)
    w0, b0, w1, b1, ws = _init_params(kp, SIZE_IN, SIZE_OUT, SIZE_H)

    # f32 path (projection shortcut).
    out = jax.block_until_ready(resnet_block_fc(x, w0, b0, w1, b1, ws))
    ref = resnet_block_fc_ref(x, w0, b0, w1, b1, ws)
    assert out.shape == (N, SIZE_OUT)
    assert jnp.allclose(out, ref, atol=1e-5, rtol=1e-5)

    # Identity-shortcut path (size_in == size_out).
    w0i, b0i, w1i, b1i, _ = _init_params(kp, SIZE_IN, SIZE_IN, SIZE_IN)
    out_id = jax.block_until_ready(resnet_block_fc(x, w0i, b0i, w1i, b1i, None))
    ref_id = resnet_block_fc_ref(x, w0i, b0i, w1i, b1i, None)
    assert jnp.allclose(out_id, ref_id, atol=1e-5, rtol=1e-5)

    # bf16-matmul path (v6e/v7x MXU fast path), validated against the f32 reference
    # with a looser tolerance.
    out_bf16 = jax.block_until_ready(
        resnet_block_fc(x, w0, b0, w1, b1, ws, use_bf16_matmul=True)
    )
    assert jnp.allclose(out_bf16, ref, atol=5e-2, rtol=5e-2)

    # Ragged N (no divisibility requirement anymore).
    xr = jax.random.normal(kx, (13, SIZE_IN), jnp.float32)
    out_r = jax.block_until_ready(resnet_block_fc(xr, w0, b0, w1, b1, ws))
    ref_r = resnet_block_fc_ref(xr, w0, b0, w1, b1, ws)
    assert out_r.shape == (13, SIZE_OUT)
    assert jnp.allclose(out_r, ref_r, atol=1e-5, rtol=1e-5)

    print("KERNEL_OK")
</pallas_src>

<mosaic_0001>
module attributes {stable_mosaic.version = 11 : i64} {
  func.func @_resblock_kernel_shortcut(%arg0: i32, %arg1: memref<8x128xf32, #tpu.memory_space<vmem>>, %arg2: memref<128x128xf32, #tpu.memory_space<vmem>>, %arg3: memref<1x128xf32, #tpu.memory_space<vmem>>, %arg4: memref<128x128xf32, #tpu.memory_space<vmem>>, %arg5: memref<1x128xf32, #tpu.memory_space<vmem>>, %arg6: memref<128x128xf32, #tpu.memory_space<vmem>>, %arg7: memref<8x128xf32, #tpu.memory_space<vmem>>) attributes {dimension_semantics = [#tpu.dimension_semantics<parallel>], iteration_bounds = array<i64: 2>, scalar_prefetch = 0 : i64, scratch_operands = 0 : i64, tpu.core_type = #tpu.core_type<tc>, window_params = [{transform_indices = @transform_0, window_bounds = array<i64: 8, 128>}, {pipeline_mode = #tpu.pipeline_mode<synchronous>, transform_indices = @transform_1, window_bounds = array<i64: 128, 128>}, {pipeline_mode = #tpu.pipeline_mode<synchronous>, transform_indices = @transform_2, window_bounds = array<i64: 1, 128>}, {pipeline_mode = #tpu.pipeline_mode<synchronous>, transform_indices = @transform_3, window_bounds = array<i64: 128, 128>}, {pipeline_mode = #tpu.pipeline_mode<synchronous>, transform_indices = @transform_4, window_bounds = array<i64: 1, 128>}, {pipeline_mode = #tpu.pipeline_mode<synchronous>, transform_indices = @transform_5, window_bounds = array<i64: 128, 128>}, {transform_indices = @transform_6, window_bounds = array<i64: 8, 128>}]} {
    %c0 = arith.constant 0 : index
    %c0_0 = arith.constant 0 : index
    %0 = vector.load %arg1[%c0, %c0_0] : memref<8x128xf32, #tpu.memory_space<vmem>>, vector<8x128xf32>
    %1 = math.cos %0 : vector<8x128xf32>
    %c0_1 = arith.constant 0 : index
    %c0_2 = arith.constant 0 : index
    %2 = vector.load %arg2[%c0_1, %c0_2] : memref<128x128xf32, #tpu.memory_space<vmem>>, vector<128x128xf32>
    %cst = arith.constant dense<0.000000e+00> : vector<8x128xf32>
    %3 = tpu.matmul %1, %2, %cst {dimension_numbers = #tpu.dot_dimension_numbers<[1], [0], [0], [1], [0, 0, 1, 1], [], []>} : vector<8x128xf32>, vector<128x128xf32>, vector<8x128xf32> -> vector<8x128xf32>
    %c0_3 = arith.constant 0 : index
    %c0_4 = arith.constant 0 : index
    %4 = vector.load %arg3[%c0_3, %c0_4] : memref<1x128xf32, #tpu.memory_space<vmem>>, vector<1x128xf32>
    %5 = vector.broadcast %4 : vector<1x128xf32> to vector<8x128xf32>
    %6 = arith.addf %3, %5 : vector<8x128xf32>
    %7 = math.cos %6 : vector<8x128xf32>
    %c0_5 = arith.constant 0 : index
    %c0_6 = arith.constant 0 : index
    %8 = vector.load %arg4[%c0_5, %c0_6] : memref<128x128xf32, #tpu.memory_space<vmem>>, vector<128x128xf32>
    %cst_7 = arith.constant dense<0.000000e+00> : vector<8x128xf32>
    %9 = tpu.matmul %7, %8, %cst_7 {dimension_numbers = #tpu.dot_dimension_numbers<[1], [0], [0], [1], [0, 0, 1, 1], [], []>} : vector<8x128xf32>, vector<128x128xf32>, vector<8x128xf32> -> vector<8x128xf32>
    %c0_8 = arith.constant 0 : index
    %c0_9 = arith.constant 0 : index
    %10 = vector.load %arg5[%c0_8, %c0_9] : memref<1x128xf32, #tpu.memory_space<vmem>>, vector<1x128xf32>
    %11 = vector.broadcast %10 : vector<1x128xf32> to vector<8x128xf32>
    %12 = arith.addf %9, %11 : vector<8x128xf32>
    %c0_10 = arith.constant 0 : index
    %c0_11 = arith.constant 0 : index
    %13 = vector.load %arg6[%c0_10, %c0_11] : memref<128x128xf32, #tpu.memory_space<vmem>>, vector<128x128xf32>
    %cst_12 = arith.constant dense<0.000000e+00> : vector<8x128xf32>
    %14 = tpu.matmul %0, %13, %cst_12 {dimension_numbers = #tpu.dot_dimension_numbers<[1], [0], [0], [1], [0, 0, 1, 1], [], []>} : vector<8x128xf32>, vector<128x128xf32>, vector<8x128xf32> -> vector<8x128xf32>
    %15 = arith.addf %14, %12 : vector<8x128xf32>
    %c0_13 = arith.constant 0 : index
    %c0_14 = arith.constant 0 : index
    %16 = vector.load %arg7[%c0_13, %c0_14] : memref<8x128xf32, #tpu.memory_space<vmem>>, vector<8x128xf32>
    tpu.vector_store %arg7[%c0_13, %c0_14], %15 {strides = array<i32>} : memref<8x128xf32, #tpu.memory_space<vmem>>, vector<8x128xf32>,
    return
  }
  func.func @transform_0(%arg0: i32) -> (i32, i32) {
    %c0_i32 = arith.constant 0 : i32
    %c0_i32_0 = arith.constant 0 : i32
    return %arg0, %c0_i32 : i32, i32
  }
  func.func @transform_1(%arg0: i32) -> (i32, i32) {
    %c0_i32 = arith.constant 0 : i32
    %c0_i32_0 = arith.constant 0 : i32
    %c0_i32_1 = arith.constant 0 : i32
    return %c0_i32, %c0_i32_0 : i32, i32
  }
  func.func @transform_2(%arg0: i32) -> (i32, i32) {
    %c0_i32 = arith.constant 0 : i32
    %c0_i32_0 = arith.constant 0 : i32
    %c0_i32_1 = arith.constant 0 : i32
    return %c0_i32, %c0_i32_0 : i32, i32
  }
  func.func @transform_3(%arg0: i32) -> (i32, i32) {
    %c0_i32 = arith.constant 0 : i32
    %c0_i32_0 = arith.constant 0 : i32
    %c0_i32_1 = arith.constant 0 : i32
    return %c0_i32, %c0_i32_0 : i32, i32
  }
  func.func @transform_4(%arg0: i32) -> (i32, i32) {
    %c0_i32 = arith.constant 0 : i32
    %c0_i32_0 = arith.constant 0 : i32
    %c0_i32_1 = arith.constant 0 : i32
    return %c0_i32, %c0_i32_0 : i32, i32
  }
  func.func @transform_5(%arg0: i32) -> (i32, i32) {
    %c0_i32 = arith.constant 0 : i32
    %c0_i32_0 = arith.constant 0 : i32
    %c0_i32_1 = arith.constant 0 : i32
    return %c0_i32, %c0_i32_0 : i32, i32
  }
  func.func @transform_6(%arg0: i32) -> (i32, i32) {
    %c0_i32 = arith.constant 0 : i32
    %c0_i32_0 = arith.constant 0 : i32
    return %arg0, %c0_i32 : i32, i32
  }
}

</mosaic_0001>

<llo_original>
// kernel: resnet_block_fc.1
$region0: #{resnet_block_fc.1}
  #allocation0 [shape = 'u32[]', space=smem, size = 0x4, offset = 0x4, fixed_abs, tag = 'smem constant byte address 0x4 - core index']
  #allocation1 [shape = 'u32[144,128]{1,0:T(1,128)}', space=vmem, size = 0x12000, scoped, tag = 'internal scratch']
  %s0 = inlined_call_operand.vmem [shape: f32[16,128], index: 0, kind: input, shape index: {}]
  %s1 = inlined_call_operand.vmem [shape: f32[128,128], index: 1, kind: input, shape index: {}]
  %s2 = inlined_call_operand.vmem [shape: f32[1,128], index: 2, kind: input, shape index: {}]
  %s3 = inlined_call_operand.vmem [shape: f32[128,128], index: 3, kind: input, shape index: {}]
  %s4 = inlined_call_operand.vmem [shape: f32[1,128], index: 4, kind: input, shape index: {}]
  %s5 = inlined_call_operand.vmem [shape: f32[128,128], index: 5, kind: input, shape index: {}]
  %s6 = inlined_call_operand.hbm [shape: f32[16,128], index: 6, kind: output, shape index: {}]
  %s7 = sld [smem:[#allocation0]]
  $region57: #{resnet_block_fc.1} parent=0
    _
  %s9 = ssub.s32 1, %s7
  %s10 = scalar_select 0, %s9, %s7
  $region1: #{resnet_block_fc.1} parent=0
    #allocation2 [shape = 'u8[8192]{0}', space=vmem, size = 0x2000, scoped, tag = 'output window, operand 0']
    #allocation3 [shape = 's32[2]{0}', space=sflag, size = 0x8, scoped, tag = 'scoped memory for resnet_block_fc.1']
    %11 = vsyncpa [#allocation3], 0
    %s12 = scalar_lea.sflag [#allocation3], 1
    %13 = vsyncpa %s12, 0
    loop: start=0, step=1, limit=4
    $region2: #{resnet_block_fc.1} parent=1 // loop_pre_header
      _
    $region3: #{resnet_block_fc.1} parent=1 // loop_header
      %s15 = sphi 0, %s19
      %p16 = scmp.ge.s32.totalorder %s15, 4
      %s25 = sphi 0, %s27
      %s28 = sphi 0, %s25
      %s29 = sphi 0, %s28
      %s45 = sphi 0, %s29
      %s49 = sphi 0, %s49
      %s51 = sphi 0, %s49
      %s52 = sphi 0, %s51
      %s66 = sphi 0, %s52
      %s70 = sphi 0, %s70
      %s72 = sphi 0, %s70
      %s73 = sphi 0, %s72
      %s87 = sphi 0, %s73
      %s91 = sphi 0, %s91
      %s93 = sphi 0, %s91
      %s94 = sphi 0, %s93
      %s108 = sphi 0, %s94
      %s112 = sphi 0, %s112
      %s114 = sphi 0, %s112
      %s115 = sphi 0, %s114
      %s129 = sphi 0, %s115
      %s133 = sphi 0, %s133
      %s135 = sphi 0, %s133
      %s136 = sphi 0, %s135
      %s150 = sphi 0, %s136
      %s156 = sphi 0, %s158
      %s159 = sphi 0, %s156
      %s160 = sphi 0, %s159
      %s176 = sphi 0, %s160
    $region4: #{resnet_block_fc.1} parent=1 // loop_header_branch
      %18 = sbr.rel (%p16) target = $region8
    $region5: #{resnet_block_fc.1} parent=1 // loop_body
      %s20 = ssub.s32 %s15, 1
      %s21 = ssub.s32 %s15, 2
      %s22 = sadd.s32 %s15, 1
      %s23 = ssub.s32 %s15, %s22
      %p24 = scmp.eq.s32.totalorder %s23, 0
      %s26 = sadd.s32 %s25, 1
      %s27 = scalar_select %p24, %s25, %s26
      %p30 = pneg %p24
      %p31 = scmp.eq.s32.totalorder %s15, 1
      %p32 = por %p30, %p31
      %p33 = scmp.ne.s32.totalorder %s25, %s28
      %p34 = scmp.eq.s32.totalorder %s15, 0
      %p35 = por %p33, %p34
      %p36 = scmp.ne.s32.totalorder %s25, %s28
      %p37 = scmp.eq.s32.totalorder %s20, 1
      %p38 = por %p36, %p37
      %p39 = scmp.ne.s32.totalorder %s28, %s29
      %p40 = scmp.eq.s32.totalorder %s20, 0
      %p41 = por %p39, %p40
      %p42 = scmp.ne.s32.totalorder %s28, %s29
      %p43 = scmp.eq.s32.totalorder %s21, 1
      %p44 = por %p42, %p43
      %p46 = scmp.ne.s32.totalorder %s29, %s45
      %p47 = scmp.eq.s32.totalorder %s21, 0
      %p48 = por %p46, %p47
      %s50 = sadd.s32 %s49, 1
      %p53 = scmp.eq.s32.totalorder %s15, 1
      %p54 = scmp.ne.s32.totalorder %s49, %s51
      %p55 = scmp.eq.s32.totalorder %s15, 0
      %p56 = por %p54, %p55
      %p57 = scmp.ne.s32.totalorder %s49, %s51
      %p58 = scmp.eq.s32.totalorder %s20, 1
      %p59 = por %p57, %p58
      %p60 = scmp.ne.s32.totalorder %s51, %s52
      %p61 = scmp.eq.s32.totalorder %s20, 0
      %p62 = por %p60, %p61
      %p63 = scmp.ne.s32.totalorder %s51, %s52
      %p64 = scmp.eq.s32.totalorder %s21, 1
      %p65 = por %p63, %p64
      %p67 = scmp.ne.s32.totalorder %s52, %s66
      %p68 = scmp.eq.s32.totalorder %s21, 0
      %p69 = por %p67, %p68
      %s71 = sadd.s32 %s70, 1
      %p74 = scmp.eq.s32.totalorder %s15, 1
      %p75 = scmp.ne.s32.totalorder %s70, %s72
      %p76 = scmp.eq.s32.totalorder %s15, 0
      %p77 = por %p75, %p76
      %p78 = scmp.ne.s32.totalorder %s70, %s72
      %p79 = scmp.eq.s32.totalorder %s20, 1
      %p80 = por %p78, %p79
      %p81 = scmp.ne.s32.totalorder %s72, %s73
      %p82 = scmp.eq.s32.totalorder %s20, 0
      %p83 = por %p81, %p82
      %p84 = scmp.ne.s32.totalorder %s72, %s73
      %p85 = scmp.eq.s32.totalorder %s21, 1
      %p86 = por %p84, %p85
      %p88 = scmp.ne.s32.totalorder %s73, %s87
      %p89 = scmp.eq.s32.totalorder %s21, 0
      %p90 = por %p88, %p89
      %s92 = sadd.s32 %s91, 1
      %p95 = scmp.eq.s32.totalorder %s15, 1
      %p96 = scmp.ne.s32.totalorder %s91, %s93
      %p97 = scmp.eq.s32.totalorder %s15, 0
      %p98 = por %p96, %p97
      %p99 = scmp.ne.s32.totalorder %s91, %s93
      %p100 = scmp.eq.s32.totalorder %s20, 1
      %p101 = por %p99, %p100
      %p102 = scmp.ne.s32.totalorder %s93, %s94
      %p103 = scmp.eq.s32.totalorder %s20, 0
      %p104 = por %p102, %p103
      %p105 = scmp.ne.s32.totalorder %s93, %s94
      %p106 = scmp.eq.s32.totalorder %s21, 1
      %p107 = por %p105, %p106
      %p109 = scmp.ne.s32.totalorder %s94, %s108
      %p110 = scmp.eq.s32.totalorder %s21, 0
      %p111 = por %p109, %p110
      %s113 = sadd.s32 %s112, 1
      %p116 = scmp.eq.s32.totalorder %s15, 1
      %p117 = scmp.ne.s32.totalorder %s112, %s114
      %p118 = scmp.eq.s32.totalorder %s15, 0
      %p119 = por %p117, %p118
      %p120 = scmp.ne.s32.totalorder %s112, %s114
      %p121 = scmp.eq.s32.totalorder %s20, 1
      %p122 = por %p120, %p121
      %p123 = scmp.ne.s32.totalorder %s114, %s115
      %p124 = scmp.eq.s32.totalorder %s20, 0
      %p125 = por %p123, %p124
      %p126 = scmp.ne.s32.totalorder %s114, %s115
      %p127 = scmp.eq.s32.totalorder %s21, 1
      %p128 = por %p126, %p127
      %p130 = scmp.ne.s32.totalorder %s115, %s129
      %p131 = scmp.eq.s32.totalorder %s21, 0
      %p132 = por %p130, %p131
      %s134 = sadd.s32 %s133, 1
      %p137 = scmp.eq.s32.totalorder %s15, 1
      %p138 = scmp.ne.s32.totalorder %s133, %s135
      %p139 = scmp.eq.s32.totalorder %s15, 0
      %p140 = por %p138, %p139
      %p141 = scmp.ne.s32.totalorder %s133, %s135
      %p142 = scmp.eq.s32.totalorder %s20, 1
      %p143 = por %p141, %p142
      %p144 = scmp.ne.s32.totalorder %s135, %s136
      %p145 = scmp.eq.s32.totalorder %s20, 0
      %p146 = por %p144, %p145
      %p147 = scmp.ne.s32.totalorder %s135, %s136
      %p148 = scmp.eq.s32.totalorder %s21, 1
      %p149 = por %p147, %p148
      %p151 = scmp.ne.s32.totalorder %s136, %s150
      %p152 = scmp.eq.s32.totalorder %s21, 0
      %p153 = por %p151, %p152
      %s154 = ssub.s32 %s15, %s22
      %p155 = scmp.eq.s32.totalorder %s154, 0
      %s157 = sadd.s32 %s156, 1
      %s158 = scalar_select %p155, %s156, %s157
      %p161 = pneg %p155
      %p162 = scmp.eq.s32.totalorder %s15, 1
      %p163 = por %p161, %p162
      %p164 = scmp.ne.s32.totalorder %s156, %s159
      %p165 = scmp.eq.s32.totalorder %s15, 0
      %p166 = por %p164, %p165
      %p167 = scmp.ne.s32.totalorder %s156, %s159
      %p168 = scmp.eq.s32.totalorder %s20, 1
      %p169 = por %p167, %p168
      %p170 = scmp.ne.s32.totalorder %s159, %s160
      %p171 = scmp.eq.s32.totalorder %s20, 0
      %p172 = por %p170, %p171
      %p173 = scmp.ne.s32.totalorder %s159, %s160
      %p174 = scmp.eq.s32.totalorder %s21, 1
      %p175 = por %p173, %p174
      %p177 = scmp.ne.s32.totalorder %s160, %s176
      %p178 = scmp.eq.s32.totalorder %s21, 0
      %p179 = por %p177, %p178
      %p180 = scmp.le.s32.totalorder 1, %s15
      %p181 = scmp.lt.s32.totalorder %s15, 3
      %p182 = pnand %p180, %p181
      %p183 = pneg %p182
      // Predicated region
      $region9: #{resnet_block_fc.1} parent=5 // pred_check
        _
      $region10: #{resnet_block_fc.1} parent=5 // pred_check_branch
        %185 = sbr.rel (%p182) target = $region12
      $region11: #{resnet_block_fc.1} parent=5 // pred_region
        %s186 = ssub.s32 %s15, 1
        // Predicated region
        $region13: #{resnet_block_fc.1} parent=11 // pred_check
          %p187 = pneg %p62
        $region14: #{resnet_block_fc.1} parent=11 // pred_check_branch
          %189 = sbr.rel (%p187) target = $region16
        $region15: #{resnet_block_fc.1} parent=11 // pred_region
          _
        $region16: #{resnet_block_fc.1} parent=11 // pred_fallthru
          _
        // Predicated region
        $region17: #{resnet_block_fc.1} parent=11 // pred_check
          %p190 = pneg %p83
        $region18: #{resnet_block_fc.1} parent=11 // pred_check_branch
          %192 = sbr.rel (%p190) target = $region20
        $region19: #{resnet_block_fc.1} parent=11 // pred_region
          _
        $region20: #{resnet_block_fc.1} parent=11 // pred_fallthru
          _
        // Predicated region
        $region21: #{resnet_block_fc.1} parent=11 // pred_check
          %p193 = pneg %p104
        $region22: #{resnet_block_fc.1} parent=11 // pred_check_branch
          %195 = sbr.rel (%p193) target = $region24
        $region23: #{resnet_block_fc.1} parent=11 // pred_region
          _
        $region24: #{resnet_block_fc.1} parent=11 // pred_fallthru
          _
        // Predicated region
        $region25: #{resnet_block_fc.1} parent=11 // pred_check
          %p196 = pneg %p125
        $region26: #{resnet_block_fc.1} parent=11 // pred_check_branch
          %198 = sbr.rel (%p196) target = $region28
        $region27: #{resnet_block_fc.1} parent=11 // pred_region
          _
        $region28: #{resnet_block_fc.1} parent=11 // pred_fallthru
          _
        // Predicated region
        $region29: #{resnet_block_fc.1} parent=11 // pred_check
          %p199 = pneg %p146
        $region30: #{resnet_block_fc.1} parent=11 // pred_check_branch
          %201 = sbr.rel (%p199) target = $region32
        $region31: #{resnet_block_fc.1} parent=11 // pred_region
          _
        $region32: #{resnet_block_fc.1} parent=11 // pred_fallthru
          _
      $region12: #{resnet_block_fc.1} parent=5 // pred_fallthru
        _
      %p202 = scmp.lt.s32.totalorder %s15, 2
      // Predicated region
      $region33: #{resnet_block_fc.1} parent=5 // pred_check
        %p203 = pneg %p202
      $region34: #{resnet_block_fc.1} parent=5 // pred_check_branch
        %205 = sbr.rel (%p203) target = $region36
      $region35: #{resnet_block_fc.1} parent=5 // pred_region
        // Predicated region
        $region37: #{resnet_block_fc.1} parent=35 // pred_check
          %p206 = pneg %p35
        $region38: #{resnet_block_fc.1} parent=35 // pred_check_branch
          %208 = sbr.rel (%p206) target = $region40
        $region39: #{resnet_block_fc.1} parent=35 // pred_region
          %p209 = scmp.lt.s32.totalorder %s15, 1
          %s210 = scalar_select %p209, %s15, 1
          %s211 = smul.addr %s210, 8
          %s212 = scalar_lea.vmem %s0, %s211
        $region40: #{resnet_block_fc.1} parent=35 // pred_fallthru
          _
      $region36: #{resnet_block_fc.1} parent=5 // pred_fallthru
        _
      %p213 = scmp.le.s32.totalorder 1, %s15
      %p214 = scmp.lt.s32.totalorder %s15, 3
      %p215 = pnand %p213, %p214
      %p216 = pneg %p215
      // Predicated region
      $region41: #{resnet_block_fc.1} parent=5 // pred_check
        _
      $region42: #{resnet_block_fc.1} parent=5 // pred_check_branch
        %218 = sbr.rel (%p215) target = $region44
      $region43: #{resnet_block_fc.1} parent=5 // pred_region
        %s219 = ssub.s32 %s15, 1
        %p220 = scmp.lt.s32.totalorder %s20, 1
        %s221 = scalar_select %p220, %s20, 1
        %s222 = smul.addr %s221, 8
        %s223 = scalar_lea.vmem %s0, %s222
        %p224 = pneg %p41
        %p225 = pneg %p38
        %p226 = pneg %p62
        %p227 = pneg %p59
        %p228 = pneg %p83
        %p229 = pneg %p80
        %p230 = pneg %p104
        %p231 = pneg %p101
        %p232 = pneg %p125
        %p233 = pneg %p122
        %p234 = pneg %p146
        %p235 = pneg %p143
        %p236 = pneg %p172
        %p237 = pneg %p169
        %s238 = sand.u32 %s159, 1
        %s239 = scalar_lea.sflag [#allocation3], %s238
        %s240 = sand.u32 %s159, 1
        %s241 = smul.addr %s240, 8
        %s242 = scalar_lea.vmem [#allocation2], %s241
        %p243 = scmp.lt.s32.totalorder %s20, 1
        %s244 = scalar_select %p243, %s20, 1
        %s245 = smul.addr %s244, 8
        %s246 = scalar_lea.vmem %s0, %s245
        %v247 = vld [vmem:[%s246] sm:$0xff]
        %v248 = vand.u32 2147483647, %v247
        %vm249 = vcmp.le.f32.partialorder %v248, 0.7853982
        %vm250 = vcmp.lt.s32.totalorder %v247, 0
        %v251 = vand.u32 %v247, 2139095040
        %v252 = vshrl.u32 %v251, 23
        %v253 = vsub.s32 %v252, 127
        %v254 = vand.u32 2147483647, %v247
        %v255 = vand.u32 %v254, 8388607
        %v256 = vor.u32 %v255, 8388608
        %v257 = vsub.s32 0, %v256
        %v258 = vadd.s32 %v253, 1
        %vm259 = vcmp.gt.s32.totalorder %v258, 0
        %v260 = vsel %vm259, %v258, 0
        %v261 = vshrl.u32 %v260, 5
        %v262 = vand.u32 %v260, 31
        %v263 = vsub.s32 32, %v262
        %v264 = vshrl.u32 683565275, %v263
        %v265 = vshll.u32 683565275, %v262
        %v266 = vshrl.u32 2475754826, %v263
        %v267 = vor.u32 %v265, %v266
        %v268 = vshll.u32 2475754826, %v262
        %v269 = vshrl.u32 2131351028, %v263
        %v270 = vor.u32 %v268, %v269
        %v271 = vshll.u32 2131351028, %v262
        %v272 = vshrl.u32 2102212464, %v263
        %v273 = vor.u32 %v271, %v272
        %v274 = vshll.u32 2102212464, %v262
        %v275 = vshrl.u32 920167782, %v263
        %v276 = vor.u32 %v274, %v275
        %v277 = vshll.u32 920167782, %v262
        %v278 = vshrl.u32 1326507024, %v263
        %v279 = vor.u32 %v277, %v278
        %vm280 = vcmp.lt.s32.totalorder %v261, 1
        %vm281 = vcmp.lt.s32.totalorder %v261, 2
        %vm282 = vcmp.lt.s32.totalorder %v261, 3
        %vm283 = vcmp.lt.s32.totalorder %v261, 4
        %v284 = vsel %vm280, %v264, %v267
        %v285 = vsel %vm283, %v273, 2102212464
        %v286 = vsel %vm282, %v270, %v285
        %v287 = vsel %vm281, %v284, %v286
        %v288 = vsel %vm280, %v267, %v270
        %v289 = vsel %vm283, %v276, 920167782
        %v290 = vsel %vm282, %v273, %v289
        %v291 = vsel %vm281, %v288, %v290
        %v292 = vsel %vm280, %v270, %v273
        %v293 = vsel %vm283, %v279, 1326507024
        %v294 = vsel %vm282, %v276, %v293
        %v295 = vsel %vm281, %v292, %v294
        %v296 = vshll.u32 %v256, 8
        %v297 = vmul.u32.u64.compose %v296, %v295
        %v298 = vextract.low.u32 %v297
        %v299 = vextract.high.u32 %v297
        %v300 = vmul.u32.u64.compose %v296, %v291
        %v301 = vextract.low.u32 %v300
        %v302 = vextract.high.u32 %v300
        %v303 = vmul.u32 %v296, %v287
        %v304 = vadd.s32 %v299, %v301
        %vm305 = vc.u32 %v299, %v301
        %v306 = vadd.s32 %v302, 1
        %v307 = vsel %vm305, %v306, %v302
        %v308 = vadd.s32 %v303, %v307
        %v309 = vadd.s32 %v308, 536870912
        %v310 = vshrl.u32 %v309, 30
        %v311 = vshll.u32 %v310, 30
        %v312 = vsub.s32 %v308, %v311
        %vm313 = vcmp.lt.s32.totalorder %v312, 0
        %v314 = vsub.s32 0, %v312
        %v315 = vsel %vm313, %v314, %v312
        %v316 = vclz %v315
        %v317 = vsub.s32 %v316, 2
        %vm318 = vcmp.gt.s32.totalorder 0, %v317
        %v319 = vsel %vm318, 0, %v317
        %v320 = vsub.s32 32, %v319
        %v321 = vshll.u32 %v312, %v319
        %v322 = vshrl.u32 %v304, %v320
        %v323 = vor.u32 %v321, %v322
        %v324 = vsub.s32 4294967266, %v319
        %v325 = vadd.s32 %v324, 127
        %v326 = vshll.u32 %v325, 23
        %v327 = vor.u32 4788187, %v326
        %v328 = vand.u32 2147483647, %v327
        %v330 = vcvt.s32.f32 %v323
        %v331 = vmul.f32 %v330, %v328
        %v332 = vxor.u32 %v331, 2147483648
        %v333 = vsel %vm250, %v332, %v331
        %v334 = vsub.s32 4, %v310
        %v335 = vsel %vm250, %v334, %v310
        %v336 = vsel %vm249, %v247, %v333
        %v337 = vsel %vm249, 0, %v335
        %v338 = vcosq.f32.pop %v336
        %v339 = vsinq.f32.pop %v336
        %vm340 = vweird.f32 %v247
        %v341 = vand.u32 %v337, 3
        %vm342 = vcmp.lt.s32.totalorder %v341, 2
        %vm343 = vcmp.eq.s32.totalorder %v341, 0
        %v344 = vxor.u32 %v339, 2147483648
        %v345 = vsel %vm343, %v338, %v344
        %vm346 = vcmp.eq.s32.totalorder %v341, 2
        %v347 = vxor.u32 %v338, 2147483648
        %v348 = vsel %vm346, %v347, %v339
        %v349 = vsel %vm342, %v345, %v348
        %v350 = vsel %vm340, nan, %v349
        %v351 = vld [vmem:[%s1] sm:$0xff]
        %v352 = vld [vmem:[%s1 + $0x8] sm:$0xff]
        %v353 = vld [vmem:[%s1 + $0x10] sm:$0xff]
        %v354 = vld [vmem:[%s1 + $0x18] sm:$0xff]
        %v355 = vld [vmem:[%s1 + $0x20] sm:$0xff]
        %v356 = vld [vmem:[%s1 + $0x28] sm:$0xff]
        %v357 = vld [vmem:[%s1 + $0x30] sm:$0xff]
        %v358 = vld [vmem:[%s1 + $0x38] sm:$0xff]
        %v359 = vld [vmem:[%s1 + $0x40] sm:$0xff]
        %v360 = vld [vmem:[%s1 + $0x48] sm:$0xff]
        %v361 = vld [vmem:[%s1 + $0x50] sm:$0xff]
        %v362 = vld [vmem:[%s1 + $0x58] sm:$0xff]
        %v363 = vld [vmem:[%s1 + $0x60] sm:$0xff]
        %v364 = vld [vmem:[%s1 + $0x68] sm:$0xff]
        %v365 = vld [vmem:[%s1 + $0x70] sm:$0xff]
        %v366 = vld [vmem:[%s1 + $0x78] sm:$0xff]
        %v367 = vld [vmem:[%s2] sm:$0x1]
        %v369 = vlaneseq
        %v370 = vshrl.u32 %v369, 7
        %v371 = vsub.s32 0, %v370
        %v372 = vrot.slane %v367, %v371
        %374 = vmatprep.subr.mxu0 0.0
        %375 = vmatpush1.msra.mxu0 %v366
        %376 = vmatprep.subr.mxu0 0.0
        %377 = vmatpush1.msra.mxu0 %v365
        %378 = vmatprep.subr.mxu0 0.0
        %379 = vmatpush1.msra.mxu0 %v364
        %380 = vmatprep.subr.mxu0 0.0
        %381 = vmatpush1.msra.mxu0 %v363
        %382 = vmatprep.subr.mxu0 0.0
        %383 = vmatpush1.msra.mxu0 %v362
        %384 = vmatprep.subr.mxu0 0.0
        %385 = vmatpush1.msra.mxu0 %v361
        %386 = vmatprep.subr.mxu0 0.0
        %387 = vmatpush1.msra.mxu0 %v360
        %388 = vmatprep.subr.mxu0 0.0
        %389 = vmatpush1.msra.mxu0 %v359
        %390 = vmatprep.subr.mxu0 0.0
        %391 = vmatpush1.msra.mxu0 %v358
        %392 = vmatprep.subr.mxu0 0.0
        %393 = vmatpush1.msra.mxu0 %v357
        %394 = vmatprep.subr.mxu0 0.0
        %395 = vmatpush1.msra.mxu0 %v356
        %396 = vmatprep.subr.mxu0 0.0
        %397 = vmatpush1.msra.mxu0 %v355
        %398 = vmatprep.subr.mxu0 0.0
        %399 = vmatpush1.msra.mxu0 %v354
        %400 = vmatprep.subr.mxu0 0.0
        %401 = vmatpush1.msra.mxu0 %v353
        %402 = vmatprep.subr.mxu0 0.0
        %403 = vmatpush1.msra.mxu0 %v352
        %404 = vmatprep.subr.mxu0 0.0
        %405 = vmatpush1.msra.mxu0 %v351
        %406 = vmatprep.subr.mxu0 0.0
        %407 = vmatpush2.msra.mxu0 0.0
        %408 = vmatprep.subr.mxu0 0.0
        %409 = vmatpush2.msra.mxu0 0.0
        %410 = vmatprep.subr.mxu0 0.0
        %411 = vmatpush2.msra.mxu0 0.0
        %412 = vmatprep.subr.mxu0 0.0
        %413 = vmatpush2.msra.mxu0 0.0
        %414 = vmatprep.subr.mxu0 0.0
        %415 = vmatpush2.msra.mxu0 0.0
        %416 = vmatprep.subr.mxu0 0.0
        %417 = vmatpush2.msra.mxu0 0.0
        %418 = vmatprep.subr.mxu0 0.0
        %419 = vmatpush2.msra.mxu0 0.0
        %420 = vmatprep.subr.mxu0 0.0
        %421 = vmatpush2.msra.mxu0 0.0
        %422 = vmatprep.subr.mxu0 0.0
        %423 = vmatpush2.msra.mxu0 0.0
        %424 = vmatprep.subr.mxu0 0.0
        %425 = vmatpush2.msra.mxu0 0.0
        %426 = vmatprep.subr.mxu0 0.0
        %427 = vmatpush2.msra.mxu0 0.0
        %428 = vmatprep.subr.mxu0 0.0
        %429 = vmatpush2.msra.mxu0 0.0
        %430 = vmatprep.subr.mxu0 0.0
        %431 = vmatpush2.msra.mxu0 0.0
        %432 = vmatprep.subr.mxu0 0.0
        %433 = vmatpush2.msra.mxu0 0.0
        %434 = vmatprep.subr.mxu0 0.0
        %435 = vmatpush2.msra.mxu0 0.0
        %436 = vmatprep.subr.mxu0 0.0
        %437 = vmatpush2.msra.mxu0 0.0
        %438 = vmatprep.mubr.f32.mxu0 0.0
        %439 = vmatmul.mubr.f32.gmra.mxu0 %v350
        %v440 = vpop.f32.mrf.mxu0
        %v441 = vadd.f32 %v372, %v440
        %v442 = vpop.f32.mrf.mxu0
        %443 = vdwg.mxu0
        %v444 = vand.u32 2147483647, %v441
        %vm445 = vcmp.le.f32.partialorder %v444, 0.7853982
        %vm446 = vcmp.lt.s32.totalorder %v441, 0
        %v447 = vand.u32 %v441, 2139095040
        %v448 = vshrl.u32 %v447, 23
        %v449 = vsub.s32 %v448, 127
        %v450 = vand.u32 2147483647, %v441
        %v451 = vand.u32 %v450, 8388607
        %v452 = vor.u32 %v451, 8388608
        %v453 = vsub.s32 0, %v452
        %v454 = vadd.s32 %v449, 1
        %vm455 = vcmp.gt.s32.totalorder %v454, 0
        %v456 = vsel %vm455, %v454, 0
        %v457 = vshrl.u32 %v456, 5
        %v458 = vand.u32 %v456, 31
        %v459 = vsub.s32 32, %v458
        %v460 = vshrl.u32 683565275, %v459
        %v461 = vshll.u32 683565275, %v458
        %v462 = vshrl.u32 2475754826, %v459
        %v463 = vor.u32 %v461, %v462
        %v464 = vshll.u32 2475754826, %v458
        %v465 = vshrl.u32 2131351028, %v459
        %v466 = vor.u32 %v464, %v465
        %v467 = vshll.u32 2131351028, %v458
        %v468 = vshrl.u32 2102212464, %v459
        %v469 = vor.u32 %v467, %v468
        %v470 = vshll.u32 2102212464, %v458
        %v471 = vshrl.u32 920167782, %v459
        %v472 = vor.u32 %v470, %v471
        %v473 = vshll.u32 920167782, %v458
        %v474 = vshrl.u32 1326507024, %v459
        %v475 = vor.u32 %v473, %v474
        %vm476 = vcmp.lt.s32.totalorder %v457, 1
        %vm477 = vcmp.lt.s32.totalorder %v457, 2
        %vm478 = vcmp.lt.s32.totalorder %v457, 3
        %vm479 = vcmp.lt.s32.totalorder %v457, 4
        %v480 = vsel %vm476, %v460, %v463
        %v481 = vsel %vm479, %v469, 2102212464
        %v482 = vsel %vm478, %v466, %v481
        %v483 = vsel %vm477, %v480, %v482
        %v484 = vsel %vm476, %v463, %v466
        %v485 = vsel %vm479, %v472, 920167782
        %v486 = vsel %vm478, %v469, %v485
        %v487 = vsel %vm477, %v484, %v486
        %v488 = vsel %vm476, %v466, %v469
        %v489 = vsel %vm479, %v475, 1326507024
        %v490 = vsel %vm478, %v472, %v489
        %v491 = vsel %vm477, %v488, %v490
        %v492 = vshll.u32 %v452, 8
        %v493 = vmul.u32.u64.compose %v492, %v491
        %v494 = vextract.low.u32 %v493
        %v495 = vextract.high.u32 %v493
        %v496 = vmul.u32.u64.compose %v492, %v487
        %v497 = vextract.low.u32 %v496
        %v498 = vextract.high.u32 %v496
        %v499 = vmul.u32 %v492, %v483
        %v500 = vadd.s32 %v495, %v497
        %vm501 = vc.u32 %v495, %v497
        %v502 = vadd.s32 %v498, 1
        %v503 = vsel %vm501, %v502, %v498
        %v504 = vadd.s32 %v499, %v503
        %v505 = vadd.s32 %v504, 536870912
        %v506 = vshrl.u32 %v505, 30
        %v507 = vshll.u32 %v506, 30
        %v508 = vsub.s32 %v504, %v507
        %vm509 = vcmp.lt.s32.totalorder %v508, 0
        %v510 = vsub.s32 0, %v508
        %v511 = vsel %vm509, %v510, %v508
        %v512 = vclz %v511
        %v513 = vsub.s32 %v512, 2
        %vm514 = vcmp.gt.s32.totalorder 0, %v513
        %v515 = vsel %vm514, 0, %v513
        %v516 = vsub.s32 32, %v515
        %v517 = vshll.u32 %v508, %v515
        %v518 = vshrl.u32 %v500, %v516
        %v519 = vor.u32 %v517, %v518
        %v520 = vsub.s32 4294967266, %v515
        %v521 = vadd.s32 %v520, 127
        %v522 = vshll.u32 %v521, 23
        %v523 = vor.u32 4788187, %v522
        %v524 = vand.u32 2147483647, %v523
        %v526 = vcvt.s32.f32 %v519
        %v527 = vmul.f32 %v526, %v524
        %v528 = vxor.u32 %v527, 2147483648
        %v529 = vsel %vm446, %v528, %v527
        %v530 = vsub.s32 4, %v506
        %v531 = vsel %vm446, %v530, %v506
        %v532 = vsel %vm445, %v441, %v529
        %v533 = vsel %vm445, 0, %v531
        %v534 = vcosq.f32.pop %v532
        %v535 = vsinq.f32.pop %v532
        %vm536 = vweird.f32 %v441
        %v537 = vand.u32 %v533, 3
        %vm538 = vcmp.lt.s32.totalorder %v537, 2
        %vm539 = vcmp.eq.s32.totalorder %v537, 0
        %v540 = vxor.u32 %v535, 2147483648
        %v541 = vsel %vm539, %v534, %v540
        %vm542 = vcmp.eq.s32.totalorder %v537, 2
        %v543 = vxor.u32 %v534, 2147483648
        %v544 = vsel %vm542, %v543, %v535
        %v545 = vsel %vm538, %v541, %v544
        %v546 = vsel %vm536, nan, %v545
        %v547 = vld [vmem:[%s3] sm:$0xff]
        %v548 = vld [vmem:[%s3 + $0x8] sm:$0xff]
        %v549 = vld [vmem:[%s3 + $0x10] sm:$0xff]
        %v550 = vld [vmem:[%s3 + $0x18] sm:$0xff]
        %v551 = vld [vmem:[%s3 + $0x20] sm:$0xff]
        %v552 = vld [vmem:[%s3 + $0x28] sm:$0xff]
        %v553 = vld [vmem:[%s3 + $0x30] sm:$0xff]
        %v554 = vld [vmem:[%s3 + $0x38] sm:$0xff]
        %v555 = vld [vmem:[%s3 + $0x40] sm:$0xff]
        %v556 = vld [vmem:[%s3 + $0x48] sm:$0xff]
        %v557 = vld [vmem:[%s3 + $0x50] sm:$0xff]
        %v558 = vld [vmem:[%s3 + $0x58] sm:$0xff]
        %v559 = vld [vmem:[%s3 + $0x60] sm:$0xff]
        %v560 = vld [vmem:[%s3 + $0x68] sm:$0xff]
        %v561 = vld [vmem:[%s3 + $0x70] sm:$0xff]
        %v562 = vld [vmem:[%s3 + $0x78] sm:$0xff]
        %v563 = vld [vmem:[%s4] sm:$0x1]
        %v565 = vlaneseq
        %v566 = vshrl.u32 %v565, 7
        %v567 = vsub.s32 0, %v566
        %v568 = vrot.slane %v563, %v567
        %570 = vmatprep.subr.mxu0 0.0
        %571 = vmatpush1.msra.mxu0 %v562
        %572 = vmatprep.subr.mxu0 0.0
        %573 = vmatpush1.msra.mxu0 %v561
        %574 = vmatprep.subr.mxu0 0.0
        %575 = vmatpush1.msra.mxu0 %v560
        %576 = vmatprep.subr.mxu0 0.0
        %577 = vmatpush1.msra.mxu0 %v559
        %578 = vmatprep.subr.mxu0 0.0
        %579 = vmatpush1.msra.mxu0 %v558
        %580 = vmatprep.subr.mxu0 0.0
        %581 = vmatpush1.msra.mxu0 %v557
        %582 = vmatprep.subr.mxu0 0.0
        %583 = vmatpush1.msra.mxu0 %v556
        %584 = vmatprep.subr.mxu0 0.0
        %585 = vmatpush1.msra.mxu0 %v555
        %586 = vmatprep.subr.mxu0 0.0
        %587 = vmatpush1.msra.mxu0 %v554
        %588 = vmatprep.subr.mxu0 0.0
        %589 = vmatpush1.msra.mxu0 %v553
        %590 = vmatprep.subr.mxu0 0.0
        %591 = vmatpush1.msra.mxu0 %v552
        %592 = vmatprep.subr.mxu0 0.0
        %593 = vmatpush1.msra.mxu0 %v551
        %594 = vmatprep.subr.mxu0 0.0
        %595 = vmatpush1.msra.mxu0 %v550
        %596 = vmatprep.subr.mxu0 0.0
        %597 = vmatpush1.msra.mxu0 %v549
        %598 = vmatprep.subr.mxu0 0.0
        %599 = vmatpush1.msra.mxu0 %v548
        %600 = vmatprep.subr.mxu0 0.0
        %601 = vmatpush1.msra.mxu0 %v547
        %602 = vmatprep.subr.mxu0 0.0
        %603 = vmatpush2.msra.mxu0 0.0
        %604 = vmatprep.subr.mxu0 0.0
        %605 = vmatpush2.msra.mxu0 0.0
        %606 = vmatprep.subr.mxu0 0.0
        %607 = vmatpush2.msra.mxu0 0.0
        %608 = vmatprep.subr.mxu0 0.0
        %609 = vmatpush2.msra.mxu0 0.0
        %610 = vmatprep.subr.mxu0 0.0
        %611 = vmatpush2.msra.mxu0 0.0
        %612 = vmatprep.subr.mxu0 0.0
        %613 = vmatpush2.msra.mxu0 0.0
        %614 = vmatprep.subr.mxu0 0.0
        %615 = vmatpush2.msra.mxu0 0.0
        %616 = vmatprep.subr.mxu0 0.0
        %617 = vmatpush2.msra.mxu0 0.0
        %618 = vmatprep.subr.mxu0 0.0
        %619 = vmatpush2.msra.mxu0 0.0
        %620 = vmatprep.subr.mxu0 0.0
        %621 = vmatpush2.msra.mxu0 0.0
        %622 = vmatprep.subr.mxu0 0.0
        %623 = vmatpush2.msra.mxu0 0.0
        %624 = vmatprep.subr.mxu0 0.0
        %625 = vmatpush2.msra.mxu0 0.0
        %626 = vmatprep.subr.mxu0 0.0
        %627 = vmatpush2.msra.mxu0 0.0
        %628 = vmatprep.subr.mxu0 0.0
        %629 = vmatpush2.msra.mxu0 0.0
        %630 = vmatprep.subr.mxu0 0.0
        %631 = vmatpush2.msra.mxu0 0.0
        %632 = vmatprep.subr.mxu0 0.0
        %633 = vmatpush2.msra.mxu0 0.0
        %634 = vmatprep.mubr.f32.mxu0 0.0
        %635 = vmatmul.mubr.f32.gmra.mxu0 %v546
        %v636 = vpop.f32.mrf.mxu0
        %v637 = vadd.f32 %v568, %v636
        %v638 = vpop.f32.mrf.mxu0
        %639 = vdwg.mxu0
        %v640 = vld [vmem:[%s5] sm:$0xff]
        %v641 = vld [vmem:[%s5 + $0x8] sm:$0xff]
        %v642 = vld [vmem:[%s5 + $0x10] sm:$0xff]
        %v643 = vld [vmem:[%s5 + $0x18] sm:$0xff]
        %v644 = vld [vmem:[%s5 + $0x20] sm:$0xff]
        %v645 = vld [vmem:[%s5 + $0x28] sm:$0xff]
        %v646 = vld [vmem:[%s5 + $0x30] sm:$0xff]
        %v647 = vld [vmem:[%s5 + $0x38] sm:$0xff]
        %v648 = vld [vmem:[%s5 + $0x40] sm:$0xff]
        %v649 = vld [vmem:[%s5 + $0x48] sm:$0xff]
        %v650 = vld [vmem:[%s5 + $0x50] sm:$0xff]
        %v651 = vld [vmem:[%s5 + $0x58] sm:$0xff]
        %v652 = vld [vmem:[%s5 + $0x60] sm:$0xff]
        %v653 = vld [vmem:[%s5 + $0x68] sm:$0xff]
        %v654 = vld [vmem:[%s5 + $0x70] sm:$0xff]
        %v655 = vld [vmem:[%s5 + $0x78] sm:$0xff]
        %656 = vmatprep.subr.mxu0 0.0
        %657 = vmatpush1.msra.mxu0 %v655
        %658 = vmatprep.subr.mxu0 0.0
        %659 = vmatpush1.msra.mxu0 %v654
        %660 = vmatprep.subr.mxu0 0.0
        %661 = vmatpush1.msra.mxu0 %v653
        %662 = vmatprep.subr.mxu0 0.0
        %663 = vmatpush1.msra.mxu0 %v652
        %664 = vmatprep.subr.mxu0 0.0
        %665 = vmatpush1.msra.mxu0 %v651
        %666 = vmatprep.subr.mxu0 0.0
        %667 = vmatpush1.msra.mxu0 %v650
        %668 = vmatprep.subr.mxu0 0.0
        %669 = vmatpush1.msra.mxu0 %v649
        %670 = vmatprep.subr.mxu0 0.0
        %671 = vmatpush1.msra.mxu0 %v648
        %672 = vmatprep.subr.mxu0 0.0
        %673 = vmatpush1.msra.mxu0 %v647
        %674 = vmatprep.subr.mxu0 0.0
        %675 = vmatpush1.msra.mxu0 %v646
        %676 = vmatprep.subr.mxu0 0.0
        %677 = vmatpush1.msra.mxu0 %v645
        %678 = vmatprep.subr.mxu0 0.0
        %679 = vmatpush1.msra.mxu0 %v644
        %680 = vmatprep.subr.mxu0 0.0
        %681 = vmatpush1.msra.mxu0 %v643
        %682 = vmatprep.subr.mxu0 0.0
        %683 = vmatpush1.msra.mxu0 %v642
        %684 = vmatprep.subr.mxu0 0.0
        %685 = vmatpush1.msra.mxu0 %v641
        %686 = vmatprep.subr.mxu0 0.0
        %687 = vmatpush1.msra.mxu0 %v640
        %688 = vmatprep.subr.mxu0 0.0
        %689 = vmatpush2.msra.mxu0 0.0
        %690 = vmatprep.subr.mxu0 0.0
        %691 = vmatpush2.msra.mxu0 0.0
        %692 = vmatprep.subr.mxu0 0.0
        %693 = vmatpush2.msra.mxu0 0.0
        %694 = vmatprep.subr.mxu0 0.0
        %695 = vmatpush2.msra.mxu0 0.0
        %696 = vmatprep.subr.mxu0 0.0
        %697 = vmatpush2.msra.mxu0 0.0
        %698 = vmatprep.subr.mxu0 0.0
        %699 = vmatpush2.msra.mxu0 0.0
        %700 = vmatprep.subr.mxu0 0.0
        %701 = vmatpush2.msra.mxu0 0.0
        %702 = vmatprep.subr.mxu0 0.0
        %703 = vmatpush2.msra.mxu0 0.0
        %704 = vmatprep.subr.mxu0 0.0
        %705 = vmatpush2.msra.mxu0 0.0
        %706 = vmatprep.subr.mxu0 0.0
        %707 = vmatpush2.msra.mxu0 0.0
        %708 = vmatprep.subr.mxu0 0.0
        %709 = vmatpush2.msra.mxu0 0.0
        %710 = vmatprep.subr.mxu0 0.0
        %711 = vmatpush2.msra.mxu0 0.0
        %712 = vmatprep.subr.mxu0 0.0
        %713 = vmatpush2.msra.mxu0 0.0
        %714 = vmatprep.subr.mxu0 0.0
        %715 = vmatpush2.msra.mxu0 0.0
        %716 = vmatprep.subr.mxu0 0.0
        %717 = vmatpush2.msra.mxu0 0.0
        %718 = vmatprep.subr.mxu0 0.0
        %719 = vmatpush2.msra.mxu0 0.0
        %720 = vmatprep.mubr.f32.mxu0 0.0
        %721 = vmatmul.mubr.f32.gmra.mxu0 %v247
        %v722 = vpop.f32.mrf.mxu0
        %v723 = vadd.f32 %v637, %v722
        %v724 = vpop.f32.mrf.mxu0
        %725 = vdwg.mxu0
        %726 = vst [vmem:[%s242] sm:$0xff] %v723
        %s727 = sand.u32 %s159, 1
        %s728 = scalar_lea.sflag [#allocation3], %s727
        %s729 = sand.u32 %s159, 1
        %s730 = smul.addr %s729, 8
        %s731 = scalar_lea.vmem [#allocation2], %s730
        // Predicated region
        $region45: #{resnet_block_fc.1} parent=43 // pred_check
          %p732 = pneg %p169
        $region46: #{resnet_block_fc.1} parent=43 // pred_check_branch
          %734 = sbr.rel (%p732) target = $region48
        $region47: #{resnet_block_fc.1} parent=43 // pred_region
          %s736 = ssub.s32 128, 128
          %737 = vsyncadd %s728, %s736
          %s738 = smul.addr %s20, 128
          %s739 = scalar_lea.hbm %s6, %s738
          %s741 = sshll.u32 %s731, 4
          %s742 = int_to_ptr.vmem [resolvable:$true] %s741
          %744 = dma.vmem_to_hbm [thread:$0]  %s742, 128, %s739, %s728
        $region48: #{resnet_block_fc.1} parent=43 // pred_fallthru
          _
      $region44: #{resnet_block_fc.1} parent=5 // pred_fallthru
        _
      %p745 = scmp.le.s32.totalorder 2, %s15
      // Predicated region
      $region49: #{resnet_block_fc.1} parent=5 // pred_check
        %p746 = pneg %p745
      $region50: #{resnet_block_fc.1} parent=5 // pred_check_branch
        %748 = sbr.rel (%p746) target = $region52
      $region51: #{resnet_block_fc.1} parent=5 // pred_region
        %s749 = ssub.s32 %s15, 2
        // Predicated region
        $region53: #{resnet_block_fc.1} parent=51 // pred_check
          %p750 = pneg %p175
        $region54: #{resnet_block_fc.1} parent=51 // pred_check_branch
          %752 = sbr.rel (%p750) target = $region56
        $region55: #{resnet_block_fc.1} parent=51 // pred_region
          %s753 = sand.u32 %s160, 1
          %s754 = scalar_lea.sflag [#allocation3], %s753
          %s755 = sand.u32 %s160, 1
          %s756 = smul.addr %s755, 8
          %s757 = scalar_lea.vmem [#allocation2], %s756
          %758 = dma.done %s754, 128
        $region56: #{resnet_block_fc.1} parent=51 // pred_fallthru
          _
      $region52: #{resnet_block_fc.1} parent=5 // pred_fallthru
        _
    $region6: #{resnet_block_fc.1} parent=1 // loop_footer
      %s19 = sadd.s32 1, %s15
    $region7: #{resnet_block_fc.1} parent=1 // loop_footer_branch
      %14 = sbr.rel target = $region3
    $region8: #{resnet_block_fc.1} parent=1 // loop_exit
      _
    %759 = vsyncpa [#allocation3], 1
    %s760 = scalar_lea.sflag [#allocation3], 1
    %761 = vsyncpa %s760, 1

</llo_original>
